<compile_context>
chip_gen: v7x
topology: tpu7x:2x2x1
jax: 0.10.0
libtpu: 0.0.40
codegen_flags: <defaults>
</compile_context>

<pallas_src>
import functools

import jax
import jax.numpy as jnp
from jax.experimental import pallas as pl
from jax.experimental.pallas import tpu as pltpu

_EPS = 1e-5


def _metanet_fused_kernel(x_ref, p_ref, out_ref, buf_ref, *,
                          layer_meta, n, l, ksize, pad):
    """Fused MetaNet forward, lane-dense layout.

    x_ref  : (N, C0, L)   raw NCL input (no wrapper-side transpose)
    p_ref  : (R, Wc)      packed params; per layer rows [row, row+rpad),
                          cols [0, K*C_in) = weights (tap-major), K*C_in = gamma, +1 = beta
    out_ref: (1, M)       lane-dense output row, M = N*(L + 2*pad)
    buf_ref: (C_max, M)   zero-padded activation buffer reused by every layer
    layer_meta: tuple of (row_offset, c_in, c_out, rpad) per layer (static)
    """
    l_stride = l + 2 * pad
    m = n * l_stride
    mw = m - 2 * pad
    inv_cnt = 1.0 / float(n * l)

    # Zero the working buffer once: per-sample halo columns stay zero for every layer
    # (each layer only writes [pad, m - pad), and in-window inter-sample halos are
    # re-zeroed by the validity mask).  No per-layer jnp.pad / concatenate copies.
    buf_ref[...] = jnp.zeros_like(buf_ref)

    # Scatter the NCL input into per-sample padded slots: sublane = channel, lane = position.
    c0 = layer_meta[0][1]
    for b in range(n):
        off = b * l_stride + pad
        buf_ref[0:c0, off:off + l] = x_ref[b].astype(jnp.float32)

    # Lane-validity mask in window coords i (window column i <-> buffer column i + pad):
    # valid iff i lands inside some sample's L real positions.
    lane = jax.lax.broadcasted_iota(jnp.int32, (1, mw), 1)
    valid = lane < l                                        # sample 0
    for b in range(1, n):
        lo = b * l_stride
        valid = jnp.logical_or(valid, (lane >= lo) & (lane < lo + l))
    mask = valid.astype(jnp.float32)                        # (1, mw)

    for (row, c_in, c_out, rpad) in layer_meta:
        # One static slab per layer out of the single packed-parameter DMA.
        w_bf = p_ref[row:row + rpad, 0:ksize * c_in].astype(jnp.bfloat16)   # (rpad, K*C_in)
        gamma = p_ref[row:row + c_out, ksize * c_in:ksize * c_in + 1]       # (c_out, 1)
        beta = p_ref[row:row + c_out, ksize * c_in + 1:ksize * c_in + 2]    # (c_out, 1)

        # Conv1d as K accumulated MXU matmuls on lane-shifted windows of the padded
        # buffer (bf16 operands, f32 accumulation).  No im2col concat is materialized.
        x_bf = buf_ref[0:c_in, :].astype(jnp.bfloat16)                      # (c_in, m)
        acc = jnp.dot(w_bf[:, 0:c_in], x_bf[:, 0:mw],
                      preferred_element_type=jnp.float32)
        for k in range(1, ksize):
            acc = acc + jnp.dot(w_bf[:, k * c_in:(k + 1) * c_in],
                                x_bf[:, k:k + mw],
                                preferred_element_type=jnp.float32)
        if c_out != rpad:                       # drop zero-padded output channels
            acc = acc[0:c_out, :]
        # (conv bias omitted: exactly cancelled by training-mode BN mean subtraction)

        # BatchNorm1d (training-mode batch stats over the N*L valid columns only),
        # folded into one scale/shift FMA, then ReLU; halo columns re-zeroed by mask.
        ym = acc * mask
        mu = jnp.sum(ym, axis=1, keepdims=True) * inv_cnt
        ex2 = jnp.sum(ym * acc, axis=1, keepdims=True) * inv_cnt
        var = jnp.maximum(ex2 - mu * mu, 0.0)   # clamp: one-pass variance can go negative
        scale = gamma * jax.lax.rsqrt(var + _EPS)
        shift = beta - mu * scale
        z = jnp.maximum(acc * scale + shift, 0.0) * mask
        buf_ref[0:c_out, pad:pad + mw] = z

    # Final layer has a single output channel: emit it as one lane-dense row.
    out_ref[...] = buf_ref[0:1, :]


def _full_spec(shape):
    nd = len(shape)
    return pl.BlockSpec(shape, lambda i, nd=nd: (0,) * nd)


def _pack_params(v, blocks, kernel_size):
    """Pack every layer's (weight, gamma, beta) into one f32 slab => a single DMA."""
    slabs = []
    layer_meta = []
    row = 0
    width = 0
    for idx, blk in enumerate(blocks):
        w = blk['w']
        if idx == 0:
            w = w[:, v, :]                        # RWConv1d channel gather (wrapper glue)
        c_out, c_in, k = w.shape
        assert k == kernel_size
        rpad = -(-c_out // 8) * 8                 # pad output channels to a sublane multiple
        # tap-major weight columns: col (k*C_in + c) <- weight[o, c, k]
        wk = jnp.transpose(w, (0, 2, 1)).reshape(c_out, k * c_in)
        slab = jnp.concatenate(
            [wk, blk['gamma'].reshape(c_out, 1), blk['beta'].reshape(c_out, 1)], axis=1)
        slab = jnp.pad(slab, ((0, rpad - c_out), (0, 0))).astype(jnp.float32)
        slabs.append(slab)
        layer_meta.append((row, int(c_in), int(c_out), int(rpad)))
        row += rpad
        width = max(width, slab.shape[1])
    width = -(-width // 128) * 128                # lane-align the packed buffer
    slabs = [jnp.pad(s, ((0, 0), (0, width - s.shape[1]))) for s in slabs]
    packed = jnp.concatenate(slabs, axis=0)
    return packed, tuple(layer_meta)


def metanet_forward(x_ncl, v, blocks, *, kernel_size, padding):
    """MetaNet.forward(x, v).

    x_ncl : (N, len(v), L)  PyTorch NCL input
    v     : (len(v),) int32 indices selecting input channels of conv_first's weight
    returns (N, 1, L) in NCL, matching the PyTorch module.
    """
    n, c0, l = x_ncl.shape
    # The module's padding dict always yields 'same' convs (pad = (k-1)//2); the fused
    # single-buffer layout relies on the length being preserved through every layer.
    assert 2 * padding == kernel_size - 1

    packed, layer_meta = _pack_params(v, blocks, kernel_size)
    assert layer_meta[0][1] == c0

    l_stride = l + 2 * padding
    m = n * l_stride
    c_max = max(8, c0, max(max(ci, co) for (_, ci, co, _) in layer_meta))

    kernel = functools.partial(
        _metanet_fused_kernel,
        layer_meta=layer_meta, n=n, l=l, ksize=kernel_size, pad=padding)

    x_f32 = x_ncl.astype(jnp.float32)
    out_flat = pl.pallas_call(
        kernel,
        out_shape=jax.ShapeDtypeStruct((1, m), jnp.float32),
        grid=(1,),
        in_specs=[_full_spec(x_f32.shape), _full_spec(packed.shape)],
        out_specs=_full_spec((1, m)),
        scratch_shapes=[pltpu.VMEM((c_max, m), jnp.float32)],
        compiler_params=pltpu.CompilerParams(
            dimension_semantics=("arbitrary",),
            vmem_limit_bytes=32 * 1024 * 1024),
    )(x_f32, packed)

    # Strip the per-sample halo columns and restore NCL (N, 1, L).
    out = out_flat.reshape(n, l_stride)[:, padding:padding + l]
    return out[:, None, :]


def init_metanet_params(key, encoder_dim, kernel_size):
    """Deterministic init mirroring nn.Conv1d / nn.BatchNorm1d defaults."""
    dims = list(encoder_dim)
    layer_dims = [(dims[0], dims[1])]                      # conv_first (full in_channels)
    for i in range(1, len(dims) - 1):                      # _encoder
        layer_dims.append((dims[i], dims[i + 1]))
    layer_dims.append((dims[-1], 1))                       # conv_last
    blocks = []
    for (cin, cout) in layer_dims:
        key, k1, k2 = jax.random.split(key, 3)
        bound = 1.0 / float(jnp.sqrt(cin * kernel_size))   # kaiming-uniform style bound
        w = jax.random.uniform(k1, (cout, cin, kernel_size), jnp.float32, -bound, bound)
        b = jax.random.uniform(k2, (cout,), jnp.float32, -bound, bound)
        blocks.append(dict(w=w, b=b,
                           gamma=jnp.ones((cout,), jnp.float32),
                           beta=jnp.zeros((cout,), jnp.float32)))
    return blocks


def _metanet_reference(x_ncl, v, blocks, *, kernel_size, padding):
    """Pure-JAX reference (includes the conv bias; training-mode BN cancels it)."""
    x = jnp.transpose(x_ncl, (0, 2, 1))                    # (N, L, C)
    for idx, blk in enumerate(blocks):
        w = blk['w']
        if idx == 0:
            w = w[:, v, :]
        c_out, c_in, k = w.shape
        n, l, _ = x.shape
        l_out = l + 2 * padding - k + 1
        xp = jnp.pad(x, ((0, 0), (padding, padding), (0, 0)))
        cols = jnp.concatenate([xp[:, t:t + l_out, :] for t in range(k)], axis=-1)
        wc = jnp.transpose(w, (2, 1, 0)).reshape(k * c_in, c_out)
        y = jnp.einsum('nlc,co->nlo', cols, wc) + blk['b']
        mu = jnp.mean(y, axis=(0, 1), keepdims=True)
        var = jnp.var(y, axis=(0, 1), keepdims=True)
        y = (y - mu) * jax.lax.rsqrt(var + _EPS)
        y = blk['gamma'] * y + blk['beta']
        x = jnp.maximum(y, 0.0)
    return jnp.transpose(x, (0, 2, 1))


if __name__ == "__main__":
    key = jax.random.PRNGKey(0)

    # Synthetic config (mirrors MetaNet(args, encoder_dim)):
    encoder_dim = [8, 16, 8]          # conv_first 8->16, encoder 16->8, conv_last 8->1
    kernel_size = 5
    padding = {1: 0, 3: 1, 5: 2, 7: 3, 9: 4}[kernel_size]   # args.meta_kernels lookup

    N, L = 2, 16
    v = jnp.array([0, 2, 5, 7], dtype=jnp.int32)             # view channel selection
    kx, kp = jax.random.split(key)
    x = jax.random.normal(kx, (N, int(v.shape[0]), L), jnp.float32)   # PyTorch NCL input

    blocks = init_metanet_params(kp, encoder_dim, kernel_size)

    h = metanet_forward(x, v, blocks, kernel_size=kernel_size, padding=padding)
    h = jax.block_until_ready(h)
    assert h.shape == (N, 1, L), h.shape
    assert bool(jnp.all(jnp.isfinite(h)))

    h_ref = _metanet_reference(x, v, blocks, kernel_size=kernel_size, padding=padding)
    max_err = float(jnp.max(jnp.abs(h - h_ref)))
    assert jnp.allclose(h, h_ref, atol=5e-2, rtol=5e-2), max_err

    print("KERNEL_OK")
</pallas_src>

<mosaic_0001>
module attributes {stable_mosaic.version = 11 : i64} {
  func.func @_metanet_fused_kernel(%arg0: i32, %arg1: memref<2x4x16xf32, #tpu.memory_space<vmem>>, %arg2: memref<32x128xf32, #tpu.memory_space<vmem>>, %arg3: memref<1x40xf32, #tpu.memory_space<vmem>>, %arg4: memref<16x40xf32, #tpu.memory_space<vmem>>) attributes {dimension_semantics = [#tpu.dimension_semantics<arbitrary>], iteration_bounds = array<i64: 1>, scalar_prefetch = 0 : i64, scratch_operands = 1 : i64, tpu.core_type = #tpu.core_type<tc>, window_params = [{pipeline_mode = #tpu.pipeline_mode<synchronous>, transform_indices = @transform_0, window_bounds = array<i64: 2, 4, 16>}, {pipeline_mode = #tpu.pipeline_mode<synchronous>, transform_indices = @transform_1, window_bounds = array<i64: 32, 128>}, {pipeline_mode = #tpu.pipeline_mode<synchronous>, transform_indices = @transform_2, window_bounds = array<i64: 1, 40>}]} {
    %cst = arith.constant 0.000000e+00 : f32
    %0 = vector.broadcast %cst : f32 to vector<16x40xf32>
    %c0 = arith.constant 0 : index
    %c0_0 = arith.constant 0 : index
    %1 = vector.load %arg4[%c0, %c0_0] : memref<16x40xf32, #tpu.memory_space<vmem>>, vector<16x40xf32>
    tpu.vector_store %arg4[%c0, %c0_0], %0 {strides = array<i32>} : memref<16x40xf32, #tpu.memory_space<vmem>>, vector<16x40xf32>,
    %c0_1 = arith.constant 0 : index
    %c0_2 = arith.constant 0 : index
    %c0_3 = arith.constant 0 : index
    %2 = vector.load %arg1[%c0_1, %c0_2, %c0_3] : memref<2x4x16xf32, #tpu.memory_space<vmem>>, vector<1x4x16xf32>
    %3 = vector.shape_cast %2 : vector<1x4x16xf32> to vector<4x16xf32>
    %c0_4 = arith.constant 0 : index
    %c2 = arith.constant 2 : index
    %4 = vector.load %arg4[%c0_4, %c2] : memref<16x40xf32, #tpu.memory_space<vmem>>, vector<4x16xf32>
    tpu.vector_store %arg4[%c0_4, %c2], %3 {strides = array<i32>} : memref<16x40xf32, #tpu.memory_space<vmem>>, vector<4x16xf32>,
    %c1 = arith.constant 1 : index
    %c0_5 = arith.constant 0 : index
    %c0_6 = arith.constant 0 : index
    %5 = vector.load %arg1[%c1, %c0_5, %c0_6] : memref<2x4x16xf32, #tpu.memory_space<vmem>>, vector<1x4x16xf32>
    %6 = vector.shape_cast %5 : vector<1x4x16xf32> to vector<4x16xf32>
    %c0_7 = arith.constant 0 : index
    %c22 = arith.constant 22 : index
    %7 = vector.load %arg4[%c0_7, %c22] : memref<16x40xf32, #tpu.memory_space<vmem>>, vector<4x16xf32>
    tpu.vector_store %arg4[%c0_7, %c22], %6 {strides = array<i32>} : memref<16x40xf32, #tpu.memory_space<vmem>>, vector<4x16xf32>,
    %8 = tpu.iota {dimensions = array<i32: 1>} : vector<1x36xi32>
    %c16_i32 = arith.constant 16 : i32
    %9 = vector.broadcast %c16_i32 : i32 to vector<1x36xi32>
    %10 = arith.cmpi slt, %8, %9 : vector<1x36xi32>
    %c20_i32 = arith.constant 20 : i32
    %11 = vector.broadcast %c20_i32 : i32 to vector<1x36xi32>
    %12 = arith.cmpi sge, %8, %11 : vector<1x36xi32>
    %c36_i32 = arith.constant 36 : i32
    %13 = vector.broadcast %c36_i32 : i32 to vector<1x36xi32>
    %14 = arith.cmpi slt, %8, %13 : vector<1x36xi32>
    %15 = arith.andi %12, %14 : vector<1x36xi1>
    %16 = arith.ori %10, %15 : vector<1x36xi1>
    %17 = arith.extui %16 : vector<1x36xi1> to vector<1x36xi32>
    %18 = arith.sitofp %17 : vector<1x36xi32> to vector<1x36xf32>
    %c0_8 = arith.constant 0 : index
    %c0_9 = arith.constant 0 : index
    %19 = vector.load %arg2[%c0_8, %c0_9] : memref<32x128xf32, #tpu.memory_space<vmem>>, vector<16x20xf32>
    %20 = arith.truncf %19 : vector<16x20xf32> to vector<16x20xbf16>
    %c0_10 = arith.constant 0 : index
    %c20 = arith.constant 20 : index
    %21 = vector.load %arg2[%c0_10, %c20] : memref<32x128xf32, #tpu.memory_space<vmem>>, vector<16x1xf32>
    %c0_11 = arith.constant 0 : index
    %c21 = arith.constant 21 : index
    %22 = vector.load %arg2[%c0_11, %c21] : memref<32x128xf32, #tpu.memory_space<vmem>>, vector<16x1xf32>
    %c0_12 = arith.constant 0 : index
    %c0_13 = arith.constant 0 : index
    %23 = vector.load %arg4[%c0_12, %c0_13] : memref<16x40xf32, #tpu.memory_space<vmem>>, vector<4x40xf32>
    %24 = arith.truncf %23 : vector<4x40xf32> to vector<4x40xbf16>
    %25 = vector.extract_strided_slice %20 {offsets = [0, 0], sizes = [16, 4], strides = [1, 1]} : vector<16x20xbf16> to vector<16x4xbf16>
    %26 = vector.extract_strided_slice %24 {offsets = [0, 0], sizes = [4, 36], strides = [1, 1]} : vector<4x40xbf16> to vector<4x36xbf16>
    %cst_14 = arith.constant dense<0.000000e+00> : vector<16x36xf32>
    %27 = tpu.matmul %25, %26, %cst_14 {dimension_numbers = #tpu.dot_dimension_numbers<[1], [0], [0], [1], [0, 0, 1, 1], [], []>} : vector<16x4xbf16>, vector<4x36xbf16>, vector<16x36xf32> -> vector<16x36xf32>
    %28 = vector.extract_strided_slice %20 {offsets = [0, 4], sizes = [16, 4], strides = [1, 1]} : vector<16x20xbf16> to vector<16x4xbf16>
    %29 = vector.extract_strided_slice %24 {offsets = [0, 1], sizes = [4, 36], strides = [1, 1]} : vector<4x40xbf16> to vector<4x36xbf16>
    %cst_15 = arith.constant dense<0.000000e+00> : vector<16x36xf32>
    %30 = tpu.matmul %28, %29, %cst_15 {dimension_numbers = #tpu.dot_dimension_numbers<[1], [0], [0], [1], [0, 0, 1, 1], [], []>} : vector<16x4xbf16>, vector<4x36xbf16>, vector<16x36xf32> -> vector<16x36xf32>
    %31 = arith.addf %27, %30 : vector<16x36xf32>
    %32 = vector.extract_strided_slice %20 {offsets = [0, 8], sizes = [16, 4], strides = [1, 1]} : vector<16x20xbf16> to vector<16x4xbf16>
    %33 = vector.extract_strided_slice %24 {offsets = [0, 2], sizes = [4, 36], strides = [1, 1]} : vector<4x40xbf16> to vector<4x36xbf16>
    %cst_16 = arith.constant dense<0.000000e+00> : vector<16x36xf32>
    %34 = tpu.matmul %32, %33, %cst_16 {dimension_numbers = #tpu.dot_dimension_numbers<[1], [0], [0], [1], [0, 0, 1, 1], [], []>} : vector<16x4xbf16>, vector<4x36xbf16>, vector<16x36xf32> -> vector<16x36xf32>
    %35 = arith.addf %31, %34 : vector<16x36xf32>
    %36 = vector.extract_strided_slice %20 {offsets = [0, 12], sizes = [16, 4], strides = [1, 1]} : vector<16x20xbf16> to vector<16x4xbf16>
    %37 = vector.extract_strided_slice %24 {offsets = [0, 3], sizes = [4, 36], strides = [1, 1]} : vector<4x40xbf16> to vector<4x36xbf16>
    %cst_17 = arith.constant dense<0.000000e+00> : vector<16x36xf32>
    %38 = tpu.matmul %36, %37, %cst_17 {dimension_numbers = #tpu.dot_dimension_numbers<[1], [0], [0], [1], [0, 0, 1, 1], [], []>} : vector<16x4xbf16>, vector<4x36xbf16>, vector<16x36xf32> -> vector<16x36xf32>
    %39 = arith.addf %35, %38 : vector<16x36xf32>
    %40 = vector.extract_strided_slice %20 {offsets = [0, 16], sizes = [16, 4], strides = [1, 1]} : vector<16x20xbf16> to vector<16x4xbf16>
    %41 = vector.extract_strided_slice %24 {offsets = [0, 4], sizes = [4, 36], strides = [1, 1]} : vector<4x40xbf16> to vector<4x36xbf16>
    %cst_18 = arith.constant dense<0.000000e+00> : vector<16x36xf32>
    %42 = tpu.matmul %40, %41, %cst_18 {dimension_numbers = #tpu.dot_dimension_numbers<[1], [0], [0], [1], [0, 0, 1, 1], [], []>} : vector<16x4xbf16>, vector<4x36xbf16>, vector<16x36xf32> -> vector<16x36xf32>
    %43 = arith.addf %39, %42 : vector<16x36xf32>
    %44 = vector.broadcast %18 : vector<1x36xf32> to vector<16x36xf32>
    %45 = arith.mulf %43, %44 : vector<16x36xf32>
    %cst_19 = arith.constant dense<0.000000e+00> : vector<16xf32>
    %46 = vector.multi_reduction <add>, %45, %cst_19 [1] : vector<16x36xf32> to vector<16xf32>
    %47 = vector.shape_cast %46 : vector<16xf32> to vector<16x1xf32>
    %cst_20 = arith.constant 3.125000e-02 : f32
    %48 = vector.broadcast %cst_20 : f32 to vector<16x1xf32>
    %49 = arith.mulf %47, %48 : vector<16x1xf32>
    %50 = arith.mulf %45, %43 : vector<16x36xf32>
    %cst_21 = arith.constant dense<0.000000e+00> : vector<16xf32>
    %51 = vector.multi_reduction <add>, %50, %cst_21 [1] : vector<16x36xf32> to vector<16xf32>
    %52 = vector.shape_cast %51 : vector<16xf32> to vector<16x1xf32>
    %cst_22 = arith.constant 3.125000e-02 : f32
    %53 = vector.broadcast %cst_22 : f32 to vector<16x1xf32>
    %54 = arith.mulf %52, %53 : vector<16x1xf32>
    %55 = arith.mulf %49, %49 : vector<16x1xf32>
    %56 = arith.subf %54, %55 : vector<16x1xf32>
    %cst_23 = arith.constant 0.000000e+00 : f32
    %57 = vector.broadcast %cst_23 : f32 to vector<16x1xf32>
    %58 = arith.maximumf %56, %57 : vector<16x1xf32>
    %cst_24 = arith.constant 9.99999974E-6 : f32
    %59 = vector.broadcast %cst_24 : f32 to vector<16x1xf32>
    %60 = arith.addf %58, %59 : vector<16x1xf32>
    %61 = math.rsqrt %60 : vector<16x1xf32>
    %62 = arith.mulf %21, %61 : vector<16x1xf32>
    %63 = arith.mulf %49, %62 : vector<16x1xf32>
    %64 = arith.subf %22, %63 : vector<16x1xf32>
    %65 = vector.broadcast %62 : vector<16x1xf32> to vector<16x36xf32>
    %66 = arith.mulf %43, %65 : vector<16x36xf32>
    %67 = vector.broadcast %64 : vector<16x1xf32> to vector<16x36xf32>
    %68 = arith.addf %66, %67 : vector<16x36xf32>
    %cst_25 = arith.constant 0.000000e+00 : f32
    %69 = vector.broadcast %cst_25 : f32 to vector<16x36xf32>
    %70 = arith.maximumf %68, %69 : vector<16x36xf32>
    %71 = vector.broadcast %18 : vector<1x36xf32> to vector<16x36xf32>
    %72 = arith.mulf %70, %71 : vector<16x36xf32>
    %c0_26 = arith.constant 0 : index
    %c2_27 = arith.constant 2 : index
    %73 = vector.load %arg4[%c0_26, %c2_27] : memref<16x40xf32, #tpu.memory_space<vmem>>, vector<16x36xf32>
    tpu.vector_store %arg4[%c0_26, %c2_27], %72 {strides = array<i32>} : memref<16x40xf32, #tpu.memory_space<vmem>>, vector<16x36xf32>,
    %c16 = arith.constant 16 : index
    %c0_28 = arith.constant 0 : index
    %74 = vector.load %arg2[%c16, %c0_28] : memref<32x128xf32, #tpu.memory_space<vmem>>, vector<8x80xf32>
    %75 = arith.truncf %74 : vector<8x80xf32> to vector<8x80xbf16>
    %c16_29 = arith.constant 16 : index
    %c80 = arith.constant 80 : index
    %76 = vector.load %arg2[%c16_29, %c80] : memref<32x128xf32, #tpu.memory_space<vmem>>, vector<8x1xf32>
    %c16_30 = arith.constant 16 : index
    %c81 = arith.constant 81 : index
    %77 = vector.load %arg2[%c16_30, %c81] : memref<32x128xf32, #tpu.memory_space<vmem>>, vector<8x1xf32>
    %c0_31 = arith.constant 0 : index
    %c0_32 = arith.constant 0 : index
    %78 = vector.load %arg4[%c0_31, %c0_32] : memref<16x40xf32, #tpu.memory_space<vmem>>, vector<16x40xf32>
    %79 = arith.truncf %78 : vector<16x40xf32> to vector<16x40xbf16>
    %80 = vector.extract_strided_slice %75 {offsets = [0, 0], sizes = [8, 16], strides = [1, 1]} : vector<8x80xbf16> to vector<8x16xbf16>
    %81 = vector.extract_strided_slice %79 {offsets = [0, 0], sizes = [16, 36], strides = [1, 1]} : vector<16x40xbf16> to vector<16x36xbf16>
    %cst_33 = arith.constant dense<0.000000e+00> : vector<8x36xf32>
    %82 = tpu.matmul %80, %81, %cst_33 {dimension_numbers = #tpu.dot_dimension_numbers<[1], [0], [0], [1], [0, 0, 1, 1], [], []>} : vector<8x16xbf16>, vector<16x36xbf16>, vector<8x36xf32> -> vector<8x36xf32>
    %83 = vector.extract_strided_slice %75 {offsets = [0, 16], sizes = [8, 16], strides = [1, 1]} : vector<8x80xbf16> to vector<8x16xbf16>
    %84 = vector.extract_strided_slice %79 {offsets = [0, 1], sizes = [16, 36], strides = [1, 1]} : vector<16x40xbf16> to vector<16x36xbf16>
    %cst_34 = arith.constant dense<0.000000e+00> : vector<8x36xf32>
    %85 = tpu.matmul %83, %84, %cst_34 {dimension_numbers = #tpu.dot_dimension_numbers<[1], [0], [0], [1], [0, 0, 1, 1], [], []>} : vector<8x16xbf16>, vector<16x36xbf16>, vector<8x36xf32> -> vector<8x36xf32>
    %86 = arith.addf %82, %85 : vector<8x36xf32>
    %87 = vector.extract_strided_slice %75 {offsets = [0, 32], sizes = [8, 16], strides = [1, 1]} : vector<8x80xbf16> to vector<8x16xbf16>
    %88 = vector.extract_strided_slice %79 {offsets = [0, 2], sizes = [16, 36], strides = [1, 1]} : vector<16x40xbf16> to vector<16x36xbf16>
    %cst_35 = arith.constant dense<0.000000e+00> : vector<8x36xf32>
    %89 = tpu.matmul %87, %88, %cst_35 {dimension_numbers = #tpu.dot_dimension_numbers<[1], [0], [0], [1], [0, 0, 1, 1], [], []>} : vector<8x16xbf16>, vector<16x36xbf16>, vector<8x36xf32> -> vector<8x36xf32>
    %90 = arith.addf %86, %89 : vector<8x36xf32>
    %91 = vector.extract_strided_slice %75 {offsets = [0, 48], sizes = [8, 16], strides = [1, 1]} : vector<8x80xbf16> to vector<8x16xbf16>
    %92 = vector.extract_strided_slice %79 {offsets = [0, 3], sizes = [16, 36], strides = [1, 1]} : vector<16x40xbf16> to vector<16x36xbf16>
    %cst_36 = arith.constant dense<0.000000e+00> : vector<8x36xf32>
    %93 = tpu.matmul %91, %92, %cst_36 {dimension_numbers = #tpu.dot_dimension_numbers<[1], [0], [0], [1], [0, 0, 1, 1], [], []>} : vector<8x16xbf16>, vector<16x36xbf16>, vector<8x36xf32> -> vector<8x36xf32>
    %94 = arith.addf %90, %93 : vector<8x36xf32>
    %95 = vector.extract_strided_slice %75 {offsets = [0, 64], sizes = [8, 16], strides = [1, 1]} : vector<8x80xbf16> to vector<8x16xbf16>
    %96 = vector.extract_strided_slice %79 {offsets = [0, 4], sizes = [16, 36], strides = [1, 1]} : vector<16x40xbf16> to vector<16x36xbf16>
    %cst_37 = arith.constant dense<0.000000e+00> : vector<8x36xf32>
    %97 = tpu.matmul %95, %96, %cst_37 {dimension_numbers = #tpu.dot_dimension_numbers<[1], [0], [0], [1], [0, 0, 1, 1], [], []>} : vector<8x16xbf16>, vector<16x36xbf16>, vector<8x36xf32> -> vector<8x36xf32>
    %98 = arith.addf %94, %97 : vector<8x36xf32>
    %99 = vector.broadcast %18 : vector<1x36xf32> to vector<8x36xf32>
    %100 = arith.mulf %98, %99 : vector<8x36xf32>
    %cst_38 = arith.constant dense<0.000000e+00> : vector<8xf32>
    %101 = vector.multi_reduction <add>, %100, %cst_38 [1] : vector<8x36xf32> to vector<8xf32>
    %102 = vector.shape_cast %101 : vector<8xf32> to vector<8x1xf32>
    %cst_39 = arith.constant 3.125000e-02 : f32
    %103 = vector.broadcast %cst_39 : f32 to vector<8x1xf32>
    %104 = arith.mulf %102, %103 : vector<8x1xf32>
    %105 = arith.mulf %100, %98 : vector<8x36xf32>
    %cst_40 = arith.constant dense<0.000000e+00> : vector<8xf32>
    %106 = vector.multi_reduction <add>, %105, %cst_40 [1] : vector<8x36xf32> to vector<8xf32>
    %107 = vector.shape_cast %106 : vector<8xf32> to vector<8x1xf32>
    %cst_41 = arith.constant 3.125000e-02 : f32
    %108 = vector.broadcast %cst_41 : f32 to vector<8x1xf32>
    %109 = arith.mulf %107, %108 : vector<8x1xf32>
    %110 = arith.mulf %104, %104 : vector<8x1xf32>
    %111 = arith.subf %109, %110 : vector<8x1xf32>
    %cst_42 = arith.constant 0.000000e+00 : f32
    %112 = vector.broadcast %cst_42 : f32 to vector<8x1xf32>
    %113 = arith.maximumf %111, %112 : vector<8x1xf32>
    %cst_43 = arith.constant 9.99999974E-6 : f32
    %114 = vector.broadcast %cst_43 : f32 to vector<8x1xf32>
    %115 = arith.addf %113, %114 : vector<8x1xf32>
    %116 = math.rsqrt %115 : vector<8x1xf32>
    %117 = arith.mulf %76, %116 : vector<8x1xf32>
    %118 = arith.mulf %104, %117 : vector<8x1xf32>
    %119 = arith.subf %77, %118 : vector<8x1xf32>
    %120 = vector.broadcast %117 : vector<8x1xf32> to vector<8x36xf32>
    %121 = arith.mulf %98, %120 : vector<8x36xf32>
    %122 = vector.broadcast %119 : vector<8x1xf32> to vector<8x36xf32>
    %123 = arith.addf %121, %122 : vector<8x36xf32>
    %cst_44 = arith.constant 0.000000e+00 : f32
    %124 = vector.broadcast %cst_44 : f32 to vector<8x36xf32>
    %125 = arith.maximumf %123, %124 : vector<8x36xf32>
    %126 = vector.broadcast %18 : vector<1x36xf32> to vector<8x36xf32>
    %127 = arith.mulf %125, %126 : vector<8x36xf32>
    %c0_45 = arith.constant 0 : index
    %c2_46 = arith.constant 2 : index
    %128 = vector.load %arg4[%c0_45, %c2_46] : memref<16x40xf32, #tpu.memory_space<vmem>>, vector<8x36xf32>
    tpu.vector_store %arg4[%c0_45, %c2_46], %127 {strides = array<i32>} : memref<16x40xf32, #tpu.memory_space<vmem>>, vector<8x36xf32>,
    %c24 = arith.constant 24 : index
    %c0_47 = arith.constant 0 : index
    %129 = vector.load %arg2[%c24, %c0_47] : memref<32x128xf32, #tpu.memory_space<vmem>>, vector<8x40xf32>
    %130 = arith.truncf %129 : vector<8x40xf32> to vector<8x40xbf16>
    %c24_48 = arith.constant 24 : index
    %c40 = arith.constant 40 : index
    %131 = vector.load %arg2[%c24_48, %c40] : memref<32x128xf32, #tpu.memory_space<vmem>>, vector<1x1xf32>
    %c24_49 = arith.constant 24 : index
    %c41 = arith.constant 41 : index
    %132 = vector.load %arg2[%c24_49, %c41] : memref<32x128xf32, #tpu.memory_space<vmem>>, vector<1x1xf32>
    %c0_50 = arith.constant 0 : index
    %c0_51 = arith.constant 0 : index
    %133 = vector.load %arg4[%c0_50, %c0_51] : memref<16x40xf32, #tpu.memory_space<vmem>>, vector<8x40xf32>
    %134 = arith.truncf %133 : vector<8x40xf32> to vector<8x40xbf16>
    %135 = vector.extract_strided_slice %130 {offsets = [0, 0], sizes = [8, 8], strides = [1, 1]} : vector<8x40xbf16> to vector<8x8xbf16>
    %136 = vector.extract_strided_slice %134 {offsets = [0, 0], sizes = [8, 36], strides = [1, 1]} : vector<8x40xbf16> to vector<8x36xbf16>
    %cst_52 = arith.constant dense<0.000000e+00> : vector<8x36xf32>
    %137 = tpu.matmul %135, %136, %cst_52 {dimension_numbers = #tpu.dot_dimension_numbers<[1], [0], [0], [1], [0, 0, 1, 1], [], []>} : vector<8x8xbf16>, vector<8x36xbf16>, vector<8x36xf32> -> vector<8x36xf32>
    %138 = vector.extract_strided_slice %130 {offsets = [0, 8], sizes = [8, 8], strides = [1, 1]} : vector<8x40xbf16> to vector<8x8xbf16>
    %139 = vector.extract_strided_slice %134 {offsets = [0, 1], sizes = [8, 36], strides = [1, 1]} : vector<8x40xbf16> to vector<8x36xbf16>
    %cst_53 = arith.constant dense<0.000000e+00> : vector<8x36xf32>
    %140 = tpu.matmul %138, %139, %cst_53 {dimension_numbers = #tpu.dot_dimension_numbers<[1], [0], [0], [1], [0, 0, 1, 1], [], []>} : vector<8x8xbf16>, vector<8x36xbf16>, vector<8x36xf32> -> vector<8x36xf32>
    %141 = arith.addf %137, %140 : vector<8x36xf32>
    %142 = vector.extract_strided_slice %130 {offsets = [0, 16], sizes = [8, 8], strides = [1, 1]} : vector<8x40xbf16> to vector<8x8xbf16>
    %143 = vector.extract_strided_slice %134 {offsets = [0, 2], sizes = [8, 36], strides = [1, 1]} : vector<8x40xbf16> to vector<8x36xbf16>
    %cst_54 = arith.constant dense<0.000000e+00> : vector<8x36xf32>
    %144 = tpu.matmul %142, %143, %cst_54 {dimension_numbers = #tpu.dot_dimension_numbers<[1], [0], [0], [1], [0, 0, 1, 1], [], []>} : vector<8x8xbf16>, vector<8x36xbf16>, vector<8x36xf32> -> vector<8x36xf32>
    %145 = arith.addf %141, %144 : vector<8x36xf32>
    %146 = vector.extract_strided_slice %130 {offsets = [0, 24], sizes = [8, 8], strides = [1, 1]} : vector<8x40xbf16> to vector<8x8xbf16>
    %147 = vector.extract_strided_slice %134 {offsets = [0, 3], sizes = [8, 36], strides = [1, 1]} : vector<8x40xbf16> to vector<8x36xbf16>
    %cst_55 = arith.constant dense<0.000000e+00> : vector<8x36xf32>
    %148 = tpu.matmul %146, %147, %cst_55 {dimension_numbers = #tpu.dot_dimension_numbers<[1], [0], [0], [1], [0, 0, 1, 1], [], []>} : vector<8x8xbf16>, vector<8x36xbf16>, vector<8x36xf32> -> vector<8x36xf32>
    %149 = arith.addf %145, %148 : vector<8x36xf32>
    %150 = vector.extract_strided_slice %130 {offsets = [0, 32], sizes = [8, 8], strides = [1, 1]} : vector<8x40xbf16> to vector<8x8xbf16>
    %151 = vector.extract_strided_slice %134 {offsets = [0, 4], sizes = [8, 36], strides = [1, 1]} : vector<8x40xbf16> to vector<8x36xbf16>
    %cst_56 = arith.constant dense<0.000000e+00> : vector<8x36xf32>
    %152 = tpu.matmul %150, %151, %cst_56 {dimension_numbers = #tpu.dot_dimension_numbers<[1], [0], [0], [1], [0, 0, 1, 1], [], []>} : vector<8x8xbf16>, vector<8x36xbf16>, vector<8x36xf32> -> vector<8x36xf32>
    %153 = arith.addf %149, %152 : vector<8x36xf32>
    %154 = vector.extract_strided_slice %153 {offsets = [0, 0], sizes = [1, 36], strides = [1, 1]} : vector<8x36xf32> to vector<1x36xf32>
    %155 = arith.mulf %154, %18 : vector<1x36xf32>
    %cst_57 = arith.constant dense<0.000000e+00> : vector<1xf32>
    %156 = vector.multi_reduction <add>, %155, %cst_57 [1] : vector<1x36xf32> to vector<1xf32>
    %157 = vector.shape_cast %156 : vector<1xf32> to vector<1x1xf32>
    %cst_58 = arith.constant 3.125000e-02 : f32
    %158 = vector.broadcast %cst_58 : f32 to vector<1x1xf32>
    %159 = arith.mulf %157, %158 : vector<1x1xf32>
    %160 = arith.mulf %155, %154 : vector<1x36xf32>
    %cst_59 = arith.constant dense<0.000000e+00> : vector<1xf32>
    %161 = vector.multi_reduction <add>, %160, %cst_59 [1] : vector<1x36xf32> to vector<1xf32>
    %162 = vector.shape_cast %161 : vector<1xf32> to vector<1x1xf32>
    %cst_60 = arith.constant 3.125000e-02 : f32
    %163 = vector.broadcast %cst_60 : f32 to vector<1x1xf32>
    %164 = arith.mulf %162, %163 : vector<1x1xf32>
    %165 = arith.mulf %159, %159 : vector<1x1xf32>
    %166 = arith.subf %164, %165 : vector<1x1xf32>
    %cst_61 = arith.constant 0.000000e+00 : f32
    %167 = vector.broadcast %cst_61 : f32 to vector<1x1xf32>
    %168 = arith.maximumf %166, %167 : vector<1x1xf32>
    %cst_62 = arith.constant 9.99999974E-6 : f32
    %169 = vector.broadcast %cst_62 : f32 to vector<1x1xf32>
    %170 = arith.addf %168, %169 : vector<1x1xf32>
    %171 = math.rsqrt %170 : vector<1x1xf32>
    %172 = arith.mulf %131, %171 : vector<1x1xf32>
    %173 = arith.mulf %159, %172 : vector<1x1xf32>
    %174 = arith.subf %132, %173 : vector<1x1xf32>
    %175 = vector.broadcast %172 : vector<1x1xf32> to vector<1x36xf32>
    %176 = arith.mulf %154, %175 : vector<1x36xf32>
    %177 = vector.broadcast %174 : vector<1x1xf32> to vector<1x36xf32>
    %178 = arith.addf %176, %177 : vector<1x36xf32>
    %cst_63 = arith.constant 0.000000e+00 : f32
    %179 = vector.broadcast %cst_63 : f32 to vector<1x36xf32>
    %180 = arith.maximumf %178, %179 : vector<1x36xf32>
    %181 = arith.mulf %180, %18 : vector<1x36xf32>
    %c0_64 = arith.constant 0 : index
    %c2_65 = arith.constant 2 : index
    %182 = vector.load %arg4[%c0_64, %c2_65] : memref<16x40xf32, #tpu.memory_space<vmem>>, vector<1x36xf32>
    tpu.vector_store %arg4[%c0_64, %c2_65], %181 {strides = array<i32>} : memref<16x40xf32, #tpu.memory_space<vmem>>, vector<1x36xf32>,
    %c0_66 = arith.constant 0 : index
    %c0_67 = arith.constant 0 : index
    %183 = vector.load %arg4[%c0_66, %c0_67] : memref<16x40xf32, #tpu.memory_space<vmem>>, vector<1x40xf32>
    %c0_68 = arith.constant 0 : index
    %c0_69 = arith.constant 0 : index
    %184 = vector.load %arg3[%c0_68, %c0_69] : memref<1x40xf32, #tpu.memory_space<vmem>>, vector<1x40xf32>
    tpu.vector_store %arg3[%c0_68, %c0_69], %183 {strides = array<i32>} : memref<1x40xf32, #tpu.memory_space<vmem>>, vector<1x40xf32>,
    return
  }
  func.func @transform_0(%arg0: i32) -> (i32, i32, i32) {
    %c0_i32 = arith.constant 0 : i32
    %c0_i32_0 = arith.constant 0 : i32
    %c0_i32_1 = arith.constant 0 : i32
    %c0_i32_2 = arith.constant 0 : i32
    return %c0_i32, %c0_i32_0, %c0_i32_1 : i32, i32, i32
  }
  func.func @transform_1(%arg0: i32) -> (i32, i32) {
    %c0_i32 = arith.constant 0 : i32
    %c0_i32_0 = arith.constant 0 : i32
    %c0_i32_1 = arith.constant 0 : i32
    return %c0_i32, %c0_i32_0 : i32, i32
  }
  func.func @transform_2(%arg0: i32) -> (i32, i32) {
    %c0_i32 = arith.constant 0 : i32
    %c0_i32_0 = arith.constant 0 : i32
    %c0_i32_1 = arith.constant 0 : i32
    return %c0_i32, %c0_i32_0 : i32, i32
  }
}

</mosaic_0001>

<llo_original>
// kernel: tpu_custom_call.1
$region0: #{tpu_custom_call.1}
  #allocation0 [shape = 'u32[]', space=smem, size = 0x4, offset = 0x4, fixed_abs, tag = 'smem constant byte address 0x4 - core index']
  #allocation1 [shape = 'u32[144,128]{1,0:T(1,128)}', space=vmem, size = 0x12000, scoped, tag = 'internal scratch']
  #allocation2 [shape = 'f32[16,40]{1,0:T(8,128)}', space=vmem, size = 0x2000, scoped, tag = 'scratch operand']
  %s0 = inlined_call_operand.hbm [shape: f32[2,4,16], index: 0, kind: input, shape index: {}]
  %s1 = inlined_call_operand.hbm [shape: f32[32,128], index: 1, kind: input, shape index: {}]
  %s2 = inlined_call_operand.hbm [shape: f32[1,40], index: 2, kind: output, shape index: {}]
  %s3 = sld [smem:[#allocation0]]
  $region26: #{tpu_custom_call.1} parent=0
    _
  %s5 = ssub.s32 1, %s3
  %s6 = scalar_select 0, %s5, %s3
  $region1: #{tpu_custom_call.1} parent=0
    #allocation3 [shape = 'u8[4096]{0}', space=vmem, size = 0x1000, scoped, tag = 'input window, operand 0, single buffered']
    #allocation4 [shape = 's32[1]{0}', space=sflag, size = 0x4, scoped, tag = 'scoped memory for tpu_custom_call.1']
    #allocation5 [shape = 's32[1]{0}', space=sflag, size = 0x4, scoped, tag = 'scoped memory for tpu_custom_call.1']
    #allocation6 [shape = 'u8[16384]{0}', space=vmem, size = 0x4000, scoped, tag = 'input window, operand 1, single buffered']
    #allocation7 [shape = 's32[1]{0}', space=sflag, size = 0x4, scoped, tag = 'scoped memory for tpu_custom_call.1']
    #allocation8 [shape = 'u8[512]{0}', space=vmem, size = 0x400, scoped, tag = 'output window, operand 0, single buffered']
    %7 = vsyncpa [#allocation4], 0
    %8 = vsyncpa [#allocation7], 0
    %9 = vsyncpa [#allocation5], 0
    // Predicated region
    $region2: #{tpu_custom_call.1} parent=1 // pred_check
      _
    $region3: #{tpu_custom_call.1} parent=1 // pred_check_branch
      %11 = sbr.rel (0) target = $region5
    $region4: #{tpu_custom_call.1} parent=1 // pred_region
      %s13 = ssub.s32 128, 128
      %14 = vsyncadd [#allocation4], %s13
      %s15 = sshll.u32 [#allocation3], 4
      %s16 = int_to_ptr.vmem [resolvable:$true] %s15
      %21 = dma.hbm_to_vmem [thread:$0]  %s0, 128, %s16, [#allocation4], 64, 64, 4
    $region5: #{tpu_custom_call.1} parent=1 // pred_fallthru
      _
    // Predicated region
    $region6: #{tpu_custom_call.1} parent=1 // pred_check
      _
    $region7: #{tpu_custom_call.1} parent=1 // pred_check_branch
      %23 = sbr.rel (0) target = $region9
    $region8: #{tpu_custom_call.1} parent=1 // pred_region
      %s25 = ssub.s32 512, 512
      %26 = vsyncadd [#allocation7], %s25
      %s27 = sshll.u32 [#allocation6], 4
      %s28 = int_to_ptr.vmem [resolvable:$true] %s27
      %33 = dma.hbm_to_vmem [thread:$0]  %s1, 512, %s28, [#allocation7], 128, 128, 8
    $region9: #{tpu_custom_call.1} parent=1 // pred_fallthru
      _
    // Predicated region
    $region10: #{tpu_custom_call.1} parent=1 // pred_check
      _
    $region11: #{tpu_custom_call.1} parent=1 // pred_check_branch
      %35 = sbr.rel (0) target = $region13
    $region12: #{tpu_custom_call.1} parent=1 // pred_region
      %36 = dma.done [#allocation4], 128
    $region13: #{tpu_custom_call.1} parent=1 // pred_fallthru
      _
    // Predicated region
    $region14: #{tpu_custom_call.1} parent=1 // pred_check
      _
    $region15: #{tpu_custom_call.1} parent=1 // pred_check_branch
      %38 = sbr.rel (0) target = $region17
    $region16: #{tpu_custom_call.1} parent=1 // pred_region
      %39 = dma.done [#allocation7], 512
    $region17: #{tpu_custom_call.1} parent=1 // pred_fallthru
      _
    %vm41 = vcmask 326656
    %42 = vst.msk [vmem:[#allocation2] sm:$0xff] %vm41, 0.0
    %43 = vst.msk [vmem:[#allocation2 + $0x8] sm:$0xff] %vm41, 0.0
    %v44 = vld [vmem:[#allocation3] sm:$0xf]
    %46 = vrot.lane.b32.xlu0 %v44, 2
    %v47 = vpop.permute.xlu0 %46
    %vm49 = vcmask 142352
    %50 = vst.msk [vmem:[#allocation2] sm:$0xf] %vm49, %v47
    %s51 = scalar_lea.vmem [#allocation3], 4
    %v52 = vld [vmem:[%s51] sm:$0xf]
    %54 = vrot.lane.b32.xlu0 %v52, 22
    %v55 = vpop.permute.xlu0 %54
    %vm57 = vcmask 306352
    %58 = vst.msk [vmem:[#allocation2] sm:$0xf] %vm57, %v55
    %v59 = vlaneseq
    %v60 = vand.u32 %v59, 127
    %vm61 = vcmp.lt.s32.totalorder %v60, 16
    %vm62 = vcmp.ge.s32.totalorder %v60, 20
    %vm63 = vcmp.lt.s32.totalorder %v60, 36
    %vm64 = vmand %vm62, %vm63
    %vm65 = vmor %vm61, %vm64
    %v66 = vsel %vm65, 1, 0
    %v67 = vcvt.s32.f32 %v66
    %v68 = vld [vmem:[#allocation6] sm:$0xff]
    %v69 = vld [vmem:[#allocation6 + $0x8] sm:$0xff]
    %v70 = vpack.c.bf16 %v69, %v68
    %v71 = vld [vmem:[#allocation2] sm:$0xf]
    %v72 = vpack.c.bf16 %v71, %v71
    %74 = vrot.lane.b32.xlu0 %v70, 124
    %v75 = vpop.permute.xlu0 %74
    %77 = vrot.lane.b32.xlu0 %v72, 127
    %v78 = vpop.permute.xlu0 %77
    %vm79 = vcmask 31744
    %v81 = vsel %vm79, %v75, 0
    %vm83 = vcmask 1041408
    %v85 = vsel %vm83, %v78, 0
    %87 = vmatprep.subr.bf16.mxu0 0
    %88 = vmatpush1.bf16.msra.mxu0 %v85
    %89 = vmatprep.subr.bf16.mxu0 0
    %90 = vmatpush1.bf16.msra.mxu0 0
    %91 = vmatprep.subr.bf16.mxu0 0
    %92 = vmatpush1.bf16.msra.mxu0 0
    %93 = vmatprep.subr.bf16.mxu0 0
    %94 = vmatpush1.bf16.msra.mxu0 0
    %95 = vmatprep.subr.bf16.mxu0 0
    %96 = vmatpush1.bf16.msra.mxu0 0
    %97 = vmatprep.subr.bf16.mxu0 0
    %98 = vmatpush1.bf16.msra.mxu0 0
    %99 = vmatprep.subr.bf16.mxu0 0
    %100 = vmatpush1.bf16.msra.mxu0 0
    %101 = vmatprep.subr.bf16.mxu0 0
    %102 = vmatpush1.bf16.msra.mxu0 0
    %103 = vmatprep.subr.bf16.mxu0 0
    %104 = vmatpush1.bf16.msra.mxu0 0
    %105 = vmatprep.subr.bf16.mxu0 0
    %106 = vmatpush1.bf16.msra.mxu0 0
    %107 = vmatprep.subr.bf16.mxu0 0
    %108 = vmatpush1.bf16.msra.mxu0 0
    %109 = vmatprep.subr.bf16.mxu0 0
    %110 = vmatpush1.bf16.msra.mxu0 0
    %111 = vmatprep.subr.bf16.mxu0 0
    %112 = vmatpush1.bf16.msra.mxu0 0
    %113 = vmatprep.subr.bf16.mxu0 0
    %114 = vmatpush1.bf16.msra.mxu0 0
    %115 = vmatprep.subr.bf16.mxu0 0
    %116 = vmatpush1.bf16.msra.mxu0 0
    %117 = vmatprep.subr.bf16.mxu0 0
    %118 = vmatpush1.bf16.msra.mxu0 0
    %119 = vmatprep.mubr.bf16.mxu0 0
    %120 = vmatmul.mubr.bf16.gmra.mrb[0].mxu0 %v81
    %v121 = vpop.f32.mrb[0].mxu0
    %v122 = vadd.f32 0.0, %v121
    %v123 = vpop.f32.mrb[0].mxu0
    %v124 = vpop.f32.mrb[0].mxu0
    %v125 = vadd.f32 0.0, %v124
    %v126 = vpop.f32.mrb[0].mxu0
    %127 = vdwg.mxu0
    %v129 = vsel %vm79, %v70, 0
    %v132 = vsel %vm83, %v72, 0
    %134 = vmatprep.subr.bf16.mxu0 0
    %135 = vmatpush1.bf16.msra.mxu0 %v132
    %136 = vmatprep.subr.bf16.mxu0 0
    %137 = vmatpush1.bf16.msra.mxu0 0
    %138 = vmatprep.subr.bf16.mxu0 0
    %139 = vmatpush1.bf16.msra.mxu0 0
    %140 = vmatprep.subr.bf16.mxu0 0
    %141 = vmatpush1.bf16.msra.mxu0 0
    %142 = vmatprep.subr.bf16.mxu0 0
    %143 = vmatpush1.bf16.msra.mxu0 0
    %144 = vmatprep.subr.bf16.mxu0 0
    %145 = vmatpush1.bf16.msra.mxu0 0
    %146 = vmatprep.subr.bf16.mxu0 0
    %147 = vmatpush1.bf16.msra.mxu0 0
    %148 = vmatprep.subr.bf16.mxu0 0
    %149 = vmatpush1.bf16.msra.mxu0 0
    %150 = vmatprep.subr.bf16.mxu0 0
    %151 = vmatpush1.bf16.msra.mxu0 0
    %152 = vmatprep.subr.bf16.mxu0 0
    %153 = vmatpush1.bf16.msra.mxu0 0
    %154 = vmatprep.subr.bf16.mxu0 0
    %155 = vmatpush1.bf16.msra.mxu0 0
    %156 = vmatprep.subr.bf16.mxu0 0
    %157 = vmatpush1.bf16.msra.mxu0 0
    %158 = vmatprep.subr.bf16.mxu0 0
    %159 = vmatpush1.bf16.msra.mxu0 0
    %160 = vmatprep.subr.bf16.mxu0 0
    %161 = vmatpush1.bf16.msra.mxu0 0
    %162 = vmatprep.subr.bf16.mxu0 0
    %163 = vmatpush1.bf16.msra.mxu0 0
    %164 = vmatprep.subr.bf16.mxu0 0
    %165 = vmatpush1.bf16.msra.mxu0 0
    %166 = vmatprep.mubr.bf16.mxu0 0
    %167 = vmatmul.mubr.bf16.gmra.mrb[0].mxu0 %v129
    %v168 = vpop.f32.mrb[0].mxu0
    %v169 = vadd.f32 %v122, %v168
    %v170 = vpop.f32.mrb[0].mxu0
    %v171 = vpop.f32.mrb[0].mxu0
    %v172 = vadd.f32 %v125, %v171
    %v173 = vpop.f32.mrb[0].mxu0
    %174 = vdwg.mxu0
    %175 = vrot.lane.b32.xlu0 %v70, 120
    %v176 = vpop.permute.xlu0 %175
    %177 = vrot.lane.b32.xlu0 %v72, 126
    %v178 = vpop.permute.xlu0 %177
    %v180 = vsel %vm79, %v176, 0
    %v183 = vsel %vm83, %v178, 0
    %185 = vmatprep.subr.bf16.mxu0 0
    %186 = vmatpush1.bf16.msra.mxu0 %v183
    %187 = vmatprep.subr.bf16.mxu0 0
    %188 = vmatpush1.bf16.msra.mxu0 0
    %189 = vmatprep.subr.bf16.mxu0 0
    %190 = vmatpush1.bf16.msra.mxu0 0
    %191 = vmatprep.subr.bf16.mxu0 0
    %192 = vmatpush1.bf16.msra.mxu0 0
    %193 = vmatprep.subr.bf16.mxu0 0
    %194 = vmatpush1.bf16.msra.mxu0 0
    %195 = vmatprep.subr.bf16.mxu0 0
    %196 = vmatpush1.bf16.msra.mxu0 0
    %197 = vmatprep.subr.bf16.mxu0 0
    %198 = vmatpush1.bf16.msra.mxu0 0
    %199 = vmatprep.subr.bf16.mxu0 0
    %200 = vmatpush1.bf16.msra.mxu0 0
    %201 = vmatprep.subr.bf16.mxu0 0
    %202 = vmatpush1.bf16.msra.mxu0 0
    %203 = vmatprep.subr.bf16.mxu0 0
    %204 = vmatpush1.bf16.msra.mxu0 0
    %205 = vmatprep.subr.bf16.mxu0 0
    %206 = vmatpush1.bf16.msra.mxu0 0
    %207 = vmatprep.subr.bf16.mxu0 0
    %208 = vmatpush1.bf16.msra.mxu0 0
    %209 = vmatprep.subr.bf16.mxu0 0
    %210 = vmatpush1.bf16.msra.mxu0 0
    %211 = vmatprep.subr.bf16.mxu0 0
    %212 = vmatpush1.bf16.msra.mxu0 0
    %213 = vmatprep.subr.bf16.mxu0 0
    %214 = vmatpush1.bf16.msra.mxu0 0
    %215 = vmatprep.subr.bf16.mxu0 0
    %216 = vmatpush1.bf16.msra.mxu0 0
    %217 = vmatprep.mubr.bf16.mxu0 0
    %218 = vmatmul.mubr.bf16.gmra.mrb[0].mxu0 %v180
    %v219 = vpop.f32.mrb[0].mxu0
    %v220 = vadd.f32 0.0, %v219
    %v221 = vpop.f32.mrb[0].mxu0
    %v222 = vpop.f32.mrb[0].mxu0
    %v223 = vadd.f32 0.0, %v222
    %v224 = vpop.f32.mrb[0].mxu0
    %225 = vdwg.mxu0
    %v226 = vadd.f32 %v169, %v220
    %v227 = vadd.f32 %v172, %v223
    %228 = vrot.lane.b32.xlu0 %v70, 116
    %v229 = vpop.permute.xlu0 %228
    %230 = vrot.lane.b32.xlu0 %v72, 125
    %v231 = vpop.permute.xlu0 %230
    %v233 = vsel %vm79, %v229, 0
    %v236 = vsel %vm83, %v231, 0
    %238 = vmatprep.subr.bf16.mxu0 0
    %239 = vmatpush1.bf16.msra.mxu0 %v236
    %240 = vmatprep.subr.bf16.mxu0 0
    %241 = vmatpush1.bf16.msra.mxu0 0
    %242 = vmatprep.subr.bf16.mxu0 0
    %243 = vmatpush1.bf16.msra.mxu0 0
    %244 = vmatprep.subr.bf16.mxu0 0
    %245 = vmatpush1.bf16.msra.mxu0 0
    %246 = vmatprep.subr.bf16.mxu0 0
    %247 = vmatpush1.bf16.msra.mxu0 0
    %248 = vmatprep.subr.bf16.mxu0 0
    %249 = vmatpush1.bf16.msra.mxu0 0
    %250 = vmatprep.subr.bf16.mxu0 0
    %251 = vmatpush1.bf16.msra.mxu0 0
    %252 = vmatprep.subr.bf16.mxu0 0
    %253 = vmatpush1.bf16.msra.mxu0 0
    %254 = vmatprep.subr.bf16.mxu0 0
    %255 = vmatpush1.bf16.msra.mxu0 0
    %256 = vmatprep.subr.bf16.mxu0 0
    %257 = vmatpush1.bf16.msra.mxu0 0
    %258 = vmatprep.subr.bf16.mxu0 0
    %259 = vmatpush1.bf16.msra.mxu0 0
    %260 = vmatprep.subr.bf16.mxu0 0
    %261 = vmatpush1.bf16.msra.mxu0 0
    %262 = vmatprep.subr.bf16.mxu0 0
    %263 = vmatpush1.bf16.msra.mxu0 0
    %264 = vmatprep.subr.bf16.mxu0 0
    %265 = vmatpush1.bf16.msra.mxu0 0
    %266 = vmatprep.subr.bf16.mxu0 0
    %267 = vmatpush1.bf16.msra.mxu0 0
    %268 = vmatprep.subr.bf16.mxu0 0
    %269 = vmatpush1.bf16.msra.mxu0 0
    %270 = vmatprep.mubr.bf16.mxu0 0
    %271 = vmatmul.mubr.bf16.gmra.mrb[0].mxu0 %v233
    %v272 = vpop.f32.mrb[0].mxu0
    %v273 = vadd.f32 0.0, %v272
    %v274 = vpop.f32.mrb[0].mxu0
    %v275 = vpop.f32.mrb[0].mxu0
    %v276 = vadd.f32 0.0, %v275
    %v277 = vpop.f32.mrb[0].mxu0
    %278 = vdwg.mxu0
    %v279 = vadd.f32 %v226, %v273
    %v280 = vadd.f32 %v227, %v276
    %281 = vrot.lane.b32.xlu0 %v70, 112
    %v282 = vpop.permute.xlu0 %281
    %283 = vrot.lane.b32.xlu0 %v72, 124
    %v284 = vpop.permute.xlu0 %283
    %v286 = vsel %vm79, %v282, 0
    %v289 = vsel %vm83, %v284, 0
    %291 = vmatprep.subr.bf16.mxu0 0
    %292 = vmatpush1.bf16.msra.mxu0 %v289
    %293 = vmatprep.subr.bf16.mxu0 0
    %294 = vmatpush1.bf16.msra.mxu0 0
    %295 = vmatprep.subr.bf16.mxu0 0
    %296 = vmatpush1.bf16.msra.mxu0 0
    %297 = vmatprep.subr.bf16.mxu0 0
    %298 = vmatpush1.bf16.msra.mxu0 0
    %299 = vmatprep.subr.bf16.mxu0 0
    %300 = vmatpush1.bf16.msra.mxu0 0
    %301 = vmatprep.subr.bf16.mxu0 0
    %302 = vmatpush1.bf16.msra.mxu0 0
    %303 = vmatprep.subr.bf16.mxu0 0
    %304 = vmatpush1.bf16.msra.mxu0 0
    %305 = vmatprep.subr.bf16.mxu0 0
    %306 = vmatpush1.bf16.msra.mxu0 0
    %307 = vmatprep.subr.bf16.mxu0 0
    %308 = vmatpush1.bf16.msra.mxu0 0
    %309 = vmatprep.subr.bf16.mxu0 0
    %310 = vmatpush1.bf16.msra.mxu0 0
    %311 = vmatprep.subr.bf16.mxu0 0
    %312 = vmatpush1.bf16.msra.mxu0 0
    %313 = vmatprep.subr.bf16.mxu0 0
    %314 = vmatpush1.bf16.msra.mxu0 0
    %315 = vmatprep.subr.bf16.mxu0 0
    %316 = vmatpush1.bf16.msra.mxu0 0
    %317 = vmatprep.subr.bf16.mxu0 0
    %318 = vmatpush1.bf16.msra.mxu0 0
    %319 = vmatprep.subr.bf16.mxu0 0
    %320 = vmatpush1.bf16.msra.mxu0 0
    %321 = vmatprep.subr.bf16.mxu0 0
    %322 = vmatpush1.bf16.msra.mxu0 0
    %323 = vmatprep.mubr.bf16.mxu0 0
    %324 = vmatmul.mubr.bf16.gmra.mrb[0].mxu0 %v286
    %v325 = vpop.f32.mrb[0].mxu0
    %v326 = vadd.f32 0.0, %v325
    %v327 = vpop.f32.mrb[0].mxu0
    %v328 = vpop.f32.mrb[0].mxu0
    %v329 = vadd.f32 0.0, %v328
    %v330 = vpop.f32.mrb[0].mxu0
    %331 = vdwg.mxu0
    %v332 = vadd.f32 %v279, %v326
    %v333 = vadd.f32 %v280, %v329
    %v334 = vmul.f32 %v332, %v67
    %v335 = vmul.f32 %v333, %v67
    %vm336 = vcmask 293888
    %v337 = vsel %vm336, %v334, 0.0
    %338 = vadd.xlane.f32.xlu0 %v337
    %v339 = vpop.xlane.xlu0 %338
    %v340 = vsel %vm336, %v335, 0.0
    %341 = vadd.xlane.f32.xlu0 %v340
    %v342 = vpop.xlane.xlu0 %341
    %v343 = vmul.f32 %v339, 0.03125
    %v344 = vmul.f32 %v342, 0.03125
    %v345 = vmul.f32 %v334, %v332
    %v346 = vmul.f32 %v335, %v333
    %v347 = vsel %vm336, %v345, 0.0
    %348 = vadd.xlane.f32.xlu0 %v347
    %v349 = vpop.xlane.xlu0 %348
    %v350 = vsel %vm336, %v346, 0.0
    %351 = vadd.xlane.f32.xlu0 %v350
    %v352 = vpop.xlane.xlu0 %351
    %v353 = vmul.f32 %v349, 0.03125
    %v354 = vmul.f32 %v352, 0.03125
    %v355 = vmul.f32 %v343, %v343
    %v356 = vmul.f32 %v344, %v344
    %v357 = vsub.f32 %v353, %v355
    %v358 = vsub.f32 %v354, %v356
    %v359 = vmax.f32 %v357, 0.0
    %v360 = vmax.f32 %v358, 0.0
    %v361 = vadd.f32 %v359, 1e-05
    %v362 = vadd.f32 %v360, 1e-05
    %v363 = vrsqrt.pop %v361
    %v364 = vrsqrt.pop %v362
    %v365 = vmul.f32 %v68, %v363
    %v366 = vmul.f32 %v69, %v364
    %v367 = vmul.f32 %v343, %v365
    %v368 = vmul.f32 %v344, %v366
    %371 = vrot.lane.b32.xlu0 %v367, 1
    %v372 = vpop.permute.xlu0 %371
    %373 = vrot.lane.b32.xlu0 %v368, 1
    %v374 = vpop.permute.xlu0 %373
    %v377 = vsub.f32 %v68, %v372
    %v378 = vsub.f32 %v69, %v374
    %380 = vset.pattern.permute.xlu0 20
    %381 = vperm.xlu0 %380, %v365
    %v382 = vpop.permute.xlu0 %381
    %385 = vset.pattern.permute.xlu0 20
    %386 = vperm.xlu0 %385, %v366
    %v387 = vpop.permute.xlu0 %386
    %v389 = vmul.f32 %v332, %v382
    %v390 = vmul.f32 %v333, %v387
    %392 = vset.pattern.permute.xlu0 21
    %393 = vperm.xlu0 %392, %v377
    %v394 = vpop.permute.xlu0 %393
    %397 = vset.pattern.permute.xlu0 21
    %398 = vperm.xlu0 %397, %v378
    %v399 = vpop.permute.xlu0 %398
    %v401 = vadd.f32 %v389, %v394
    %v402 = vadd.f32 %v390, %v399
    %v403 = vmax.f32 %v401, 0.0
    %v404 = vmax.f32 %v402, 0.0
    %v405 = vmul.f32 %v403, %v67
    %v406 = vmul.f32 %v404, %v67
    %409 = vrot.lane.b32.xlu0 %v405, 2
    %v410 = vpop.permute.xlu0 %409
    %411 = vrot.lane.b32.xlu0 %v406, 2
    %v412 = vpop.permute.xlu0 %411
    %vm415 = vcmask 310288
    %416 = vst.msk [vmem:[#allocation2] sm:$0xff] %vm415, %v410
    %417 = vst.msk [vmem:[#allocation2 + $0x8] sm:$0xff] %vm415, %v412
    %v418 = vld [vmem:[#allocation6 + $0x10] sm:$0xff]
    %v419 = vpack.c.bf16 %v418, %v418
    %v420 = vld [vmem:[#allocation2] sm:$0xff]
    %v421 = vld [vmem:[#allocation2 + $0x8] sm:$0xff]
    %v422 = vpack.c.bf16 %v421, %v420
    %424 = vrot.lane.b32.xlu0 %v419, 112
    %v425 = vpop.permute.xlu0 %424
    %427 = vrot.lane.b32.xlu0 %v422, 127
    %v428 = vpop.permute.xlu0 %427
    %vm430 = vcmask 130048
    %v432 = vsel %vm430, %v425, 0
    %434 = vmatprep.subr.bf16.mxu0 0
    %435 = vmatpush1.bf16.msra.mxu0 %v428
    %436 = vmatprep.subr.bf16.mxu0 0
    %437 = vmatpush1.bf16.msra.mxu0 0
    %438 = vmatprep.subr.bf16.mxu0 0
    %439 = vmatpush1.bf16.msra.mxu0 0
    %440 = vmatprep.subr.bf16.mxu0 0
    %441 = vmatpush1.bf16.msra.mxu0 0
    %442 = vmatprep.subr.bf16.mxu0 0
    %443 = vmatpush1.bf16.msra.mxu0 0
    %444 = vmatprep.subr.bf16.mxu0 0
    %445 = vmatpush1.bf16.msra.mxu0 0
    %446 = vmatprep.subr.bf16.mxu0 0
    %447 = vmatpush1.bf16.msra.mxu0 0
    %448 = vmatprep.subr.bf16.mxu0 0
    %449 = vmatpush1.bf16.msra.mxu0 0
    %450 = vmatprep.subr.bf16.mxu0 0
    %451 = vmatpush1.bf16.msra.mxu0 0
    %452 = vmatprep.subr.bf16.mxu0 0
    %453 = vmatpush1.bf16.msra.mxu0 0
    %454 = vmatprep.subr.bf16.mxu0 0
    %455 = vmatpush1.bf16.msra.mxu0 0
    %456 = vmatprep.subr.bf16.mxu0 0
    %457 = vmatpush1.bf16.msra.mxu0 0
    %458 = vmatprep.subr.bf16.mxu0 0
    %459 = vmatpush1.bf16.msra.mxu0 0
    %460 = vmatprep.subr.bf16.mxu0 0
    %461 = vmatpush1.bf16.msra.mxu0 0
    %462 = vmatprep.subr.bf16.mxu0 0
    %463 = vmatpush1.bf16.msra.mxu0 0
    %464 = vmatprep.subr.bf16.mxu0 0
    %465 = vmatpush1.bf16.msra.mxu0 0
    %466 = vmatprep.mubr.bf16.mxu0 0
    %467 = vmatmul.mubr.bf16.gmra.mrb[0].mxu0 %v432
    %v468 = vpop.f32.mrb[0].mxu0
    %v469 = vadd.f32 0.0, %v468
    %v470 = vpop.f32.mrb[0].mxu0
    %v471 = vpop.f32.mrb[0].mxu0
    %v472 = vpop.f32.mrb[0].mxu0
    %473 = vdwg.mxu0
    %v475 = vsel %vm430, %v419, 0
    %477 = vmatprep.subr.bf16.mxu0 0
    %478 = vmatpush1.bf16.msra.mxu0 %v422
    %479 = vmatprep.subr.bf16.mxu0 0
    %480 = vmatpush1.bf16.msra.mxu0 0
    %481 = vmatprep.subr.bf16.mxu0 0
    %482 = vmatpush1.bf16.msra.mxu0 0
    %483 = vmatprep.subr.bf16.mxu0 0
    %484 = vmatpush1.bf16.msra.mxu0 0
    %485 = vmatprep.subr.bf16.mxu0 0
    %486 = vmatpush1.bf16.msra.mxu0 0
    %487 = vmatprep.subr.bf16.mxu0 0
    %488 = vmatpush1.bf16.msra.mxu0 0
    %489 = vmatprep.subr.bf16.mxu0 0
    %490 = vmatpush1.bf16.msra.mxu0 0
    %491 = vmatprep.subr.bf16.mxu0 0
    %492 = vmatpush1.bf16.msra.mxu0 0
    %493 = vmatprep.subr.bf16.mxu0 0
    %494 = vmatpush1.bf16.msra.mxu0 0
    %495 = vmatprep.subr.bf16.mxu0 0
    %496 = vmatpush1.bf16.msra.mxu0 0
    %497 = vmatprep.subr.bf16.mxu0 0
    %498 = vmatpush1.bf16.msra.mxu0 0
    %499 = vmatprep.subr.bf16.mxu0 0
    %500 = vmatpush1.bf16.msra.mxu0 0
    %501 = vmatprep.subr.bf16.mxu0 0
    %502 = vmatpush1.bf16.msra.mxu0 0
    %503 = vmatprep.subr.bf16.mxu0 0
    %504 = vmatpush1.bf16.msra.mxu0 0
    %505 = vmatprep.subr.bf16.mxu0 0
    %506 = vmatpush1.bf16.msra.mxu0 0
    %507 = vmatprep.subr.bf16.mxu0 0
    %508 = vmatpush1.bf16.msra.mxu0 0
    %509 = vmatprep.mubr.bf16.mxu0 0
    %510 = vmatmul.mubr.bf16.gmra.mrb[0].mxu0 %v475
    %v511 = vpop.f32.mrb[0].mxu0
    %v512 = vadd.f32 %v469, %v511
    %v513 = vpop.f32.mrb[0].mxu0
    %v514 = vpop.f32.mrb[0].mxu0
    %v515 = vpop.f32.mrb[0].mxu0
    %516 = vdwg.mxu0
    %517 = vrot.lane.b32.xlu0 %v419, 96
    %v518 = vpop.permute.xlu0 %517
    %519 = vrot.lane.b32.xlu0 %v422, 126
    %v520 = vpop.permute.xlu0 %519
    %v523 = vsel %vm430, %v518, 0
    %525 = vmatprep.subr.bf16.mxu0 0
    %526 = vmatpush1.bf16.msra.mxu0 %v520
    %527 = vmatprep.subr.bf16.mxu0 0
    %528 = vmatpush1.bf16.msra.mxu0 0
    %529 = vmatprep.subr.bf16.mxu0 0
    %530 = vmatpush1.bf16.msra.mxu0 0
    %531 = vmatprep.subr.bf16.mxu0 0
    %532 = vmatpush1.bf16.msra.mxu0 0
    %533 = vmatprep.subr.bf16.mxu0 0
    %534 = vmatpush1.bf16.msra.mxu0 0
    %535 = vmatprep.subr.bf16.mxu0 0
    %536 = vmatpush1.bf16.msra.mxu0 0
    %537 = vmatprep.subr.bf16.mxu0 0
    %538 = vmatpush1.bf16.msra.mxu0 0
    %539 = vmatprep.subr.bf16.mxu0 0
    %540 = vmatpush1.bf16.msra.mxu0 0
    %541 = vmatprep.subr.bf16.mxu0 0
    %542 = vmatpush1.bf16.msra.mxu0 0
    %543 = vmatprep.subr.bf16.mxu0 0
    %544 = vmatpush1.bf16.msra.mxu0 0
    %545 = vmatprep.subr.bf16.mxu0 0
    %546 = vmatpush1.bf16.msra.mxu0 0
    %547 = vmatprep.subr.bf16.mxu0 0
    %548 = vmatpush1.bf16.msra.mxu0 0
    %549 = vmatprep.subr.bf16.mxu0 0
    %550 = vmatpush1.bf16.msra.mxu0 0
    %551 = vmatprep.subr.bf16.mxu0 0
    %552 = vmatpush1.bf16.msra.mxu0 0
    %553 = vmatprep.subr.bf16.mxu0 0
    %554 = vmatpush1.bf16.msra.mxu0 0
    %555 = vmatprep.subr.bf16.mxu0 0
    %556 = vmatpush1.bf16.msra.mxu0 0
    %557 = vmatprep.mubr.bf16.mxu0 0
    %558 = vmatmul.mubr.bf16.gmra.mrb[0].mxu0 %v523
    %v559 = vpop.f32.mrb[0].mxu0
    %v560 = vadd.f32 0.0, %v559
    %v561 = vpop.f32.mrb[0].mxu0
    %v562 = vpop.f32.mrb[0].mxu0
    %v563 = vpop.f32.mrb[0].mxu0
    %564 = vdwg.mxu0
    %v565 = vadd.f32 %v512, %v560
    %566 = vrot.lane.b32.xlu0 %v419, 80
    %v567 = vpop.permute.xlu0 %566
    %568 = vrot.lane.b32.xlu0 %v422, 125
    %v569 = vpop.permute.xlu0 %568
    %v572 = vsel %vm430, %v567, 0
    %574 = vmatprep.subr.bf16.mxu0 0
    %575 = vmatpush1.bf16.msra.mxu0 %v569
    %576 = vmatprep.subr.bf16.mxu0 0
    %577 = vmatpush1.bf16.msra.mxu0 0
    %578 = vmatprep.subr.bf16.mxu0 0
    %579 = vmatpush1.bf16.msra.mxu0 0
    %580 = vmatprep.subr.bf16.mxu0 0
    %581 = vmatpush1.bf16.msra.mxu0 0
    %582 = vmatprep.subr.bf16.mxu0 0
    %583 = vmatpush1.bf16.msra.mxu0 0
    %584 = vmatprep.subr.bf16.mxu0 0
    %585 = vmatpush1.bf16.msra.mxu0 0
    %586 = vmatprep.subr.bf16.mxu0 0
    %587 = vmatpush1.bf16.msra.mxu0 0
    %588 = vmatprep.subr.bf16.mxu0 0
    %589 = vmatpush1.bf16.msra.mxu0 0
    %590 = vmatprep.subr.bf16.mxu0 0
    %591 = vmatpush1.bf16.msra.mxu0 0
    %592 = vmatprep.subr.bf16.mxu0 0
    %593 = vmatpush1.bf16.msra.mxu0 0
    %594 = vmatprep.subr.bf16.mxu0 0
    %595 = vmatpush1.bf16.msra.mxu0 0
    %596 = vmatprep.subr.bf16.mxu0 0
    %597 = vmatpush1.bf16.msra.mxu0 0
    %598 = vmatprep.subr.bf16.mxu0 0
    %599 = vmatpush1.bf16.msra.mxu0 0
    %600 = vmatprep.subr.bf16.mxu0 0
    %601 = vmatpush1.bf16.msra.mxu0 0
    %602 = vmatprep.subr.bf16.mxu0 0
    %603 = vmatpush1.bf16.msra.mxu0 0
    %604 = vmatprep.subr.bf16.mxu0 0
    %605 = vmatpush1.bf16.msra.mxu0 0
    %606 = vmatprep.mubr.bf16.mxu0 0
    %607 = vmatmul.mubr.bf16.gmra.mrb[0].mxu0 %v572
    %v608 = vpop.f32.mrb[0].mxu0
    %v609 = vadd.f32 0.0, %v608
    %v610 = vpop.f32.mrb[0].mxu0
    %v611 = vpop.f32.mrb[0].mxu0
    %v612 = vpop.f32.mrb[0].mxu0
    %613 = vdwg.mxu0
    %v614 = vadd.f32 %v565, %v609
    %615 = vrot.lane.b32.xlu0 %v419, 64
    %v616 = vpop.permute.xlu0 %615
    %617 = vrot.lane.b32.xlu0 %v422, 124
    %v618 = vpop.permute.xlu0 %617
    %v621 = vsel %vm430, %v616, 0
    %623 = vmatprep.subr.bf16.mxu0 0
    %624 = vmatpush1.bf16.msra.mxu0 %v618
    %625 = vmatprep.subr.bf16.mxu0 0
    %626 = vmatpush1.bf16.msra.mxu0 0
    %627 = vmatprep.subr.bf16.mxu0 0
    %628 = vmatpush1.bf16.msra.mxu0 0
    %629 = vmatprep.subr.bf16.mxu0 0
    %630 = vmatpush1.bf16.msra.mxu0 0
    %631 = vmatprep.subr.bf16.mxu0 0
    %632 = vmatpush1.bf16.msra.mxu0 0
    %633 = vmatprep.subr.bf16.mxu0 0
    %634 = vmatpush1.bf16.msra.mxu0 0
    %635 = vmatprep.subr.bf16.mxu0 0
    %636 = vmatpush1.bf16.msra.mxu0 0
    %637 = vmatprep.subr.bf16.mxu0 0
    %638 = vmatpush1.bf16.msra.mxu0 0
    %639 = vmatprep.subr.bf16.mxu0 0
    %640 = vmatpush1.bf16.msra.mxu0 0
    %641 = vmatprep.subr.bf16.mxu0 0
    %642 = vmatpush1.bf16.msra.mxu0 0
    %643 = vmatprep.subr.bf16.mxu0 0
    %644 = vmatpush1.bf16.msra.mxu0 0
    %645 = vmatprep.subr.bf16.mxu0 0
    %646 = vmatpush1.bf16.msra.mxu0 0
    %647 = vmatprep.subr.bf16.mxu0 0
    %648 = vmatpush1.bf16.msra.mxu0 0
    %649 = vmatprep.subr.bf16.mxu0 0
    %650 = vmatpush1.bf16.msra.mxu0 0
    %651 = vmatprep.subr.bf16.mxu0 0
    %652 = vmatpush1.bf16.msra.mxu0 0
    %653 = vmatprep.subr.bf16.mxu0 0
    %654 = vmatpush1.bf16.msra.mxu0 0
    %655 = vmatprep.mubr.bf16.mxu0 0
    %656 = vmatmul.mubr.bf16.gmra.mrb[0].mxu0 %v621
    %v657 = vpop.f32.mrb[0].mxu0
    %v658 = vadd.f32 0.0, %v657
    %v659 = vpop.f32.mrb[0].mxu0
    %v660 = vpop.f32.mrb[0].mxu0
    %v661 = vpop.f32.mrb[0].mxu0
    %662 = vdwg.mxu0
    %v663 = vadd.f32 %v614, %v658
    %v664 = vmul.f32 %v663, %v67
    %v665 = vsel %vm336, %v664, 0.0
    %666 = vadd.xlane.f32.xlu0 %v665
    %v667 = vpop.xlane.xlu0 %666
    %v668 = vmul.f32 %v667, 0.03125
    %v669 = vmul.f32 %v664, %v663
    %v670 = vsel %vm336, %v669, 0.0
    %671 = vadd.xlane.f32.xlu0 %v670
    %v672 = vpop.xlane.xlu0 %671
    %v673 = vmul.f32 %v672, 0.03125
    %v674 = vmul.f32 %v668, %v668
    %v675 = vsub.f32 %v673, %v674
    %v676 = vmax.f32 %v675, 0.0
    %v677 = vadd.f32 %v676, 1e-05
    %v678 = vrsqrt.pop %v677
    %v679 = vmul.f32 %v418, %v678
    %v680 = vmul.f32 %v668, %v679
    %682 = vrot.lane.b32.xlu0 %v680, 1
    %v683 = vpop.permute.xlu0 %682
    %v685 = vsub.f32 %v418, %v683
    %687 = vset.pattern.permute.xlu0 80
    %688 = vperm.xlu0 %687, %v679
    %v689 = vpop.permute.xlu0 %688
    %v691 = vmul.f32 %v663, %v689
    %693 = vset.pattern.permute.xlu0 81
    %694 = vperm.xlu0 %693, %v685
    %v695 = vpop.permute.xlu0 %694
    %v697 = vadd.f32 %v691, %v695
    %v698 = vmax.f32 %v697, 0.0
    %v699 = vmul.f32 %v698, %v67
    %701 = vrot.lane.b32.xlu0 %v699, 2
    %v702 = vpop.permute.xlu0 %701
    %704 = vst.msk [vmem:[#allocation2] sm:$0xff] %vm415, %v702
    %v705 = vld [vmem:[#allocation6 + $0x18] sm:$0xff]
    %v706 = vpack.c.bf16 %v705, %v705
    %v707 = vld [vmem:[#allocation6 + $0x18] sm:$0x1]
    %v708 = vld [vmem:[#allocation2] sm:$0xff]
    %v709 = vpack.c.bf16 %v708, %v708
    %711 = vrot.lane.b32.xlu0 %v706, 120
    %v712 = vpop.permute.xlu0 %711
    %714 = vrot.lane.b32.xlu0 %v709, 127
    %v715 = vpop.permute.xlu0 %714
    %vm716 = vcmask 64512
    %v718 = vsel %vm716, %v712, 0
    %vm720 = vcmask 1043456
    %v722 = vsel %vm720, %v715, 0
    %724 = vmatprep.subr.bf16.mxu0 0
    %725 = vmatpush1.bf16.msra.mxu0 %v722
    %726 = vmatprep.subr.bf16.mxu0 0
    %727 = vmatpush1.bf16.msra.mxu0 0
    %728 = vmatprep.subr.bf16.mxu0 0
    %729 = vmatpush1.bf16.msra.mxu0 0
    %730 = vmatprep.subr.bf16.mxu0 0
    %731 = vmatpush1.bf16.msra.mxu0 0
    %732 = vmatprep.subr.bf16.mxu0 0
    %733 = vmatpush1.bf16.msra.mxu0 0
    %734 = vmatprep.subr.bf16.mxu0 0
    %735 = vmatpush1.bf16.msra.mxu0 0
    %736 = vmatprep.subr.bf16.mxu0 0
    %737 = vmatpush1.bf16.msra.mxu0 0
    %738 = vmatprep.subr.bf16.mxu0 0
    %739 = vmatpush1.bf16.msra.mxu0 0
    %740 = vmatprep.subr.bf16.mxu0 0
    %741 = vmatpush1.bf16.msra.mxu0 0
    %742 = vmatprep.subr.bf16.mxu0 0
    %743 = vmatpush1.bf16.msra.mxu0 0
    %744 = vmatprep.subr.bf16.mxu0 0
    %745 = vmatpush1.bf16.msra.mxu0 0
    %746 = vmatprep.subr.bf16.mxu0 0
    %747 = vmatpush1.bf16.msra.mxu0 0
    %748 = vmatprep.subr.bf16.mxu0 0
    %749 = vmatpush1.bf16.msra.mxu0 0
    %750 = vmatprep.subr.bf16.mxu0 0
    %751 = vmatpush1.bf16.msra.mxu0 0
    %752 = vmatprep.subr.bf16.mxu0 0
    %753 = vmatpush1.bf16.msra.mxu0 0
    %754 = vmatprep.subr.bf16.mxu0 0
    %755 = vmatpush1.bf16.msra.mxu0 0
    %756 = vmatprep.mubr.bf16.mxu0 0
    %757 = vmatmul.mubr.bf16.gmra.mrb[0].mxu0 %v718
    %v758 = vpop.f32.mrb[0].mxu0
    %v759 = vadd.f32 0.0, %v758
    %v760 = vpop.f32.mrb[0].mxu0
    %v761 = vpop.f32.mrb[0].mxu0
    %v762 = vpop.f32.mrb[0].mxu0
    %763 = vdwg.mxu0
    %v765 = vsel %vm716, %v706, 0
    %v768 = vsel %vm720, %v709, 0
    %770 = vmatprep.subr.bf16.mxu0 0
    %771 = vmatpush1.bf16.msra.mxu0 %v768
    %772 = vmatprep.subr.bf16.mxu0 0
    %773 = vmatpush1.bf16.msra.mxu0 0
    %774 = vmatprep.subr.bf16.mxu0 0
    %775 = vmatpush1.bf16.msra.mxu0 0
    %776 = vmatprep.subr.bf16.mxu0 0
    %777 = vmatpush1.bf16.msra.mxu0 0
    %778 = vmatprep.subr.bf16.mxu0 0
    %779 = vmatpush1.bf16.msra.mxu0 0
    %780 = vmatprep.subr.bf16.mxu0 0
    %781 = vmatpush1.bf16.msra.mxu0 0
    %782 = vmatprep.subr.bf16.mxu0 0
    %783 = vmatpush1.bf16.msra.mxu0 0
    %784 = vmatprep.subr.bf16.mxu0 0
    %785 = vmatpush1.bf16.msra.mxu0 0
    %786 = vmatprep.subr.bf16.mxu0 0
    %787 = vmatpush1.bf16.msra.mxu0 0
    %788 = vmatprep.subr.bf16.mxu0 0
    %789 = vmatpush1.bf16.msra.mxu0 0
    %790 = vmatprep.subr.bf16.mxu0 0
    %791 = vmatpush1.bf16.msra.mxu0 0
    %792 = vmatprep.subr.bf16.mxu0 0
    %793 = vmatpush1.bf16.msra.mxu0 0
    %794 = vmatprep.subr.bf16.mxu0 0
    %795 = vmatpush1.bf16.msra.mxu0 0
    %796 = vmatprep.subr.bf16.mxu0 0
    %797 = vmatpush1.bf16.msra.mxu0 0
    %798 = vmatprep.subr.bf16.mxu0 0
    %799 = vmatpush1.bf16.msra.mxu0 0
    %800 = vmatprep.subr.bf16.mxu0 0
    %801 = vmatpush1.bf16.msra.mxu0 0
    %802 = vmatprep.mubr.bf16.mxu0 0
    %803 = vmatmul.mubr.bf16.gmra.mrb[0].mxu0 %v765
    %v804 = vpop.f32.mrb[0].mxu0
    %v805 = vadd.f32 %v759, %v804
    %v806 = vpop.f32.mrb[0].mxu0
    %v807 = vpop.f32.mrb[0].mxu0
    %v808 = vpop.f32.mrb[0].mxu0
    %809 = vdwg.mxu0
    %810 = vrot.lane.b32.xlu0 %v706, 112
    %v811 = vpop.permute.xlu0 %810
    %812 = vrot.lane.b32.xlu0 %v709, 126
    %v813 = vpop.permute.xlu0 %812
    %v815 = vsel %vm716, %v811, 0
    %v818 = vsel %vm720, %v813, 0
    %820 = vmatprep.subr.bf16.mxu0 0
    %821 = vmatpush1.bf16.msra.mxu0 %v818
    %822 = vmatprep.subr.bf16.mxu0 0
    %823 = vmatpush1.bf16.msra.mxu0 0
    %824 = vmatprep.subr.bf16.mxu0 0
    %825 = vmatpush1.bf16.msra.mxu0 0
    %826 = vmatprep.subr.bf16.mxu0 0
    %827 = vmatpush1.bf16.msra.mxu0 0
    %828 = vmatprep.subr.bf16.mxu0 0
    %829 = vmatpush1.bf16.msra.mxu0 0
    %830 = vmatprep.subr.bf16.mxu0 0
    %831 = vmatpush1.bf16.msra.mxu0 0
    %832 = vmatprep.subr.bf16.mxu0 0
    %833 = vmatpush1.bf16.msra.mxu0 0
    %834 = vmatprep.subr.bf16.mxu0 0
    %835 = vmatpush1.bf16.msra.mxu0 0
    %836 = vmatprep.subr.bf16.mxu0 0
    %837 = vmatpush1.bf16.msra.mxu0 0
    %838 = vmatprep.subr.bf16.mxu0 0
    %839 = vmatpush1.bf16.msra.mxu0 0
    %840 = vmatprep.subr.bf16.mxu0 0
    %841 = vmatpush1.bf16.msra.mxu0 0
    %842 = vmatprep.subr.bf16.mxu0 0
    %843 = vmatpush1.bf16.msra.mxu0 0
    %844 = vmatprep.subr.bf16.mxu0 0
    %845 = vmatpush1.bf16.msra.mxu0 0
    %846 = vmatprep.subr.bf16.mxu0 0
    %847 = vmatpush1.bf16.msra.mxu0 0
    %848 = vmatprep.subr.bf16.mxu0 0
    %849 = vmatpush1.bf16.msra.mxu0 0
    %850 = vmatprep.subr.bf16.mxu0 0
    %851 = vmatpush1.bf16.msra.mxu0 0
    %852 = vmatprep.mubr.bf16.mxu0 0
    %853 = vmatmul.mubr.bf16.gmra.mrb[0].mxu0 %v815
    %v854 = vpop.f32.mrb[0].mxu0
    %v855 = vadd.f32 0.0, %v854
    %v856 = vpop.f32.mrb[0].mxu0
    %v857 = vpop.f32.mrb[0].mxu0
    %v858 = vpop.f32.mrb[0].mxu0
    %859 = vdwg.mxu0
    %v860 = vadd.f32 %v805, %v855
    %861 = vrot.lane.b32.xlu0 %v706, 104
    %v862 = vpop.permute.xlu0 %861
    %863 = vrot.lane.b32.xlu0 %v709, 125
    %v864 = vpop.permute.xlu0 %863
    %v866 = vsel %vm716, %v862, 0
    %v869 = vsel %vm720, %v864, 0
    %871 = vmatprep.subr.bf16.mxu0 0
    %872 = vmatpush1.bf16.msra.mxu0 %v869
    %873 = vmatprep.subr.bf16.mxu0 0
    %874 = vmatpush1.bf16.msra.mxu0 0
    %875 = vmatprep.subr.bf16.mxu0 0
    %876 = vmatpush1.bf16.msra.mxu0 0
    %877 = vmatprep.subr.bf16.mxu0 0
    %878 = vmatpush1.bf16.msra.mxu0 0
    %879 = vmatprep.subr.bf16.mxu0 0
    %880 = vmatpush1.bf16.msra.mxu0 0
    %881 = vmatprep.subr.bf16.mxu0 0
    %882 = vmatpush1.bf16.msra.mxu0 0
    %883 = vmatprep.subr.bf16.mxu0 0
    %884 = vmatpush1.bf16.msra.mxu0 0
    %885 = vmatprep.subr.bf16.mxu0 0
    %886 = vmatpush1.bf16.msra.mxu0 0
    %887 = vmatprep.subr.bf16.mxu0 0
    %888 = vmatpush1.bf16.msra.mxu0 0
    %889 = vmatprep.subr.bf16.mxu0 0
    %890 = vmatpush1.bf16.msra.mxu0 0
    %891 = vmatprep.subr.bf16.mxu0 0
    %892 = vmatpush1.bf16.msra.mxu0 0
    %893 = vmatprep.subr.bf16.mxu0 0
    %894 = vmatpush1.bf16.msra.mxu0 0
    %895 = vmatprep.subr.bf16.mxu0 0
    %896 = vmatpush1.bf16.msra.mxu0 0
    %897 = vmatprep.subr.bf16.mxu0 0
    %898 = vmatpush1.bf16.msra.mxu0 0
    %899 = vmatprep.subr.bf16.mxu0 0
    %900 = vmatpush1.bf16.msra.mxu0 0
    %901 = vmatprep.subr.bf16.mxu0 0
    %902 = vmatpush1.bf16.msra.mxu0 0
    %903 = vmatprep.mubr.bf16.mxu0 0
    %904 = vmatmul.mubr.bf16.gmra.mrb[0].mxu0 %v866
    %v905 = vpop.f32.mrb[0].mxu0
    %v906 = vadd.f32 0.0, %v905
    %v907 = vpop.f32.mrb[0].mxu0
    %v908 = vpop.f32.mrb[0].mxu0
    %v909 = vpop.f32.mrb[0].mxu0
    %910 = vdwg.mxu0
    %v911 = vadd.f32 %v860, %v906
    %912 = vrot.lane.b32.xlu0 %v706, 96
    %v913 = vpop.permute.xlu0 %912
    %914 = vrot.lane.b32.xlu0 %v709, 124
    %v915 = vpop.permute.xlu0 %914
    %v917 = vsel %vm716, %v913, 0
    %v920 = vsel %vm720, %v915, 0
    %922 = vmatprep.subr.bf16.mxu0 0
    %923 = vmatpush1.bf16.msra.mxu0 %v920
    %924 = vmatprep.subr.bf16.mxu0 0
    %925 = vmatpush1.bf16.msra.mxu0 0
    %926 = vmatprep.subr.bf16.mxu0 0
    %927 = vmatpush1.bf16.msra.mxu0 0
    %928 = vmatprep.subr.bf16.mxu0 0
    %929 = vmatpush1.bf16.msra.mxu0 0
    %930 = vmatprep.subr.bf16.mxu0 0
    %931 = vmatpush1.bf16.msra.mxu0 0
    %932 = vmatprep.subr.bf16.mxu0 0
    %933 = vmatpush1.bf16.msra.mxu0 0
    %934 = vmatprep.subr.bf16.mxu0 0
    %935 = vmatpush1.bf16.msra.mxu0 0
    %936 = vmatprep.subr.bf16.mxu0 0
    %937 = vmatpush1.bf16.msra.mxu0 0
    %938 = vmatprep.subr.bf16.mxu0 0
    %939 = vmatpush1.bf16.msra.mxu0 0
    %940 = vmatprep.subr.bf16.mxu0 0
    %941 = vmatpush1.bf16.msra.mxu0 0
    %942 = vmatprep.subr.bf16.mxu0 0
    %943 = vmatpush1.bf16.msra.mxu0 0
    %944 = vmatprep.subr.bf16.mxu0 0
    %945 = vmatpush1.bf16.msra.mxu0 0
    %946 = vmatprep.subr.bf16.mxu0 0
    %947 = vmatpush1.bf16.msra.mxu0 0
    %948 = vmatprep.subr.bf16.mxu0 0
    %949 = vmatpush1.bf16.msra.mxu0 0
    %950 = vmatprep.subr.bf16.mxu0 0
    %951 = vmatpush1.bf16.msra.mxu0 0
    %952 = vmatprep.subr.bf16.mxu0 0
    %953 = vmatpush1.bf16.msra.mxu0 0
    %954 = vmatprep.mubr.bf16.mxu0 0
    %955 = vmatmul.mubr.bf16.gmra.mrb[0].mxu0 %v917
    %v956 = vpop.f32.mrb[0].mxu0
    %v957 = vadd.f32 0.0, %v956
    %v958 = vpop.f32.mrb[0].mxu0
    %v959 = vpop.f32.mrb[0].mxu0
    %v960 = vpop.f32.mrb[0].mxu0
    %961 = vdwg.mxu0
    %v962 = vadd.f32 %v911, %v957
    %v963 = vmul.f32 %v962, %v67
    %vm964 = vcmask 286720
    %v965 = vsel %vm964, %v963, 0.0
    %966 = vadd.xlane.f32.xlu0 %v965
    %v967 = vpop.xlane.xlu0 %966
    %v968 = vmul.f32 %v967, 0.03125
    %v969 = vmul.f32 %v963, %v962
    %v970 = vsel %vm964, %v969, 0.0
    %971 = vadd.xlane.f32.xlu0 %v970
    %v972 = vpop.xlane.xlu0 %971
    %v973 = vmul.f32 %v972, 0.03125
    %v974 = vmul.f32 %v968, %v968
    %v975 = vsub.f32 %v973, %v974
    %v976 = vmax.f32 %v975, 0.0
    %v977 = vadd.f32 %v976, 1e-05
    %v978 = vrsqrt.pop %v977
    %v979 = vmul.f32 %v707, %v978
    %v980 = vmul.f32 %v968, %v979
    %982 = vrot.lane.b32.xlu0 %v980, 1
    %v983 = vpop.permute.xlu0 %982
    %v985 = vsub.f32 %v707, %v983
    %987 = vset.pattern.permute.xlu0 40
    %988 = vperm.xlu0 %987, %v979
    %v989 = vpop.permute.xlu0 %988
    %v991 = vmul.f32 %v962, %v989
    %993 = vset.pattern.permute.xlu0 41
    %994 = vperm.xlu0 %993, %v985
    %v995 = vpop.permute.xlu0 %994
    %v997 = vadd.f32 %v991, %v995
    %v998 = vmax.f32 %v997, 0.0
    %v999 = vmul.f32 %v998, %v67
    %1001 = vrot.lane.b32.xlu0 %v999, 2
    %v1002 = vpop.permute.xlu0 %1001
    %vm1004 = vcmask 303120
    %1005 = vst.msk [vmem:[#allocation2] sm:$0x1] %vm1004, %v1002
    %v1006 = vld [vmem:[#allocation2] sm:$0x1]
    %vm1007 = vcmask 319488
    %1008 = vst.msk [vmem:[#allocation8] sm:$0x1] %vm1007, %v1006
    // Predicated region
    $region18: #{tpu_custom_call.1} parent=1 // pred_check
      _
    $region19: #{tpu_custom_call.1} parent=1 // pred_check_branch
      %1010 = sbr.rel (0) target = $region21
    $region20: #{tpu_custom_call.1} parent=1 // pred_region
      %s1012 = ssub.s32 16, 16
      %1013 = vsyncadd [#allocation5], %s1012
      %s1015 = sshll.u32 [#allocation8], 4
      %s1016 = int_to_ptr.vmem [resolvable:$true] %s1015
      %1018 = dma.vmem_to_hbm [thread:$0]  %s1016, 16, %s2, [#allocation5]
    $region21: #{tpu_custom_call.1} parent=1 // pred_fallthru
      _
    // Predicated region
    $region22: #{tpu_custom_call.1} parent=1 // pred_check
      _
    $region23: #{tpu_custom_call.1} parent=1 // pred_check_branch
      %1020 = sbr.rel (0) target = $region25
    $region24: #{tpu_custom_call.1} parent=1 // pred_region
      %1021 = dma.done [#allocation5], 16
    $region25: #{tpu_custom_call.1} parent=1 // pred_fallthru
      _
    %1022 = vsyncpa [#allocation4], 1
    %1023 = vsyncpa [#allocation7], 1
    %1024 = vsyncpa [#allocation5], 1

</llo_original>
